<compile_context>
chip_gen: v6e
topology: v6e:2x2x1
jax: 0.10.0
libtpu: 0.0.40
codegen_flags: <defaults>
</compile_context>

<pallas_src>
import jax
import jax.numpy as jnp
from jax.experimental import pallas as pl
from jax.experimental.pallas import tpu as pltpu

INPUT_SIZE = 20
HIDDEN_SIZE = int(20 * 0.66) + 9   # = 22
OUTPUT_SIZE = 9                    # num_params_to_predict
_LANE = 128


def _round_up(n, m):
    return ((n + m - 1) // m) * m


def _mlp_kernel(xT_ref, w1_ref, b1_ref, w2_ref, b2_ref, o_ref):
    # xT_ref: [INPUT_SIZE, TILE_B]  bf16   (batch on the lane axis)
    # w1_ref: [HIDDEN_SIZE, INPUT_SIZE] bf16 ; b1_ref: [HIDDEN_SIZE, 1] f32
    # w2_ref: [OUTPUT_SIZE, HIDDEN_SIZE] bf16 ; b2_ref: [OUTPUT_SIZE, 1] f32
    # o_ref : [OUTPUT_SIZE, TILE_B] f32
    xT = xT_ref[...]

    # Layer 1 on the MXU with f32 accumulation; N = TILE_B is lane-dense.
    h = jnp.dot(w1_ref[...], xT, preferred_element_type=jnp.float32) + b1_ref[...]

    # SiLU in f32: x * sigmoid(x); reciprocal goes to the EUP slot.
    sig = pl.reciprocal(1.0 + jnp.exp(-h), approx=True)
    h = h * sig

    # Layer 2 on the MXU (tiny K=22), f32 accumulation.
    out = jnp.dot(w2_ref[...], h.astype(w2_ref.dtype),
                  preferred_element_type=jnp.float32) + b2_ref[...]
    o_ref[...] = out.astype(o_ref.dtype)


def simple_ann_forward(x, w1, b1, w2, b2, *, tile_b=1024):
    """x: [batch, seq_len, feature_dim] with seq_len*feature_dim == 20.

    Weights are in torch layout: w1 [HIDDEN, INPUT], b1 [HIDDEN],
    w2 [OUTPUT, HIDDEN], b2 [OUTPUT].  Returns [batch, OUTPUT_SIZE] float32.
    """
    batch, seq_len, feature_dim = x.shape
    assert seq_len * feature_dim == INPUT_SIZE, "seq_len * feature_dim must equal 20"

    # Lane-dense batch tiling: TILE_B is a multiple of 128; pad batch to a
    # multiple of TILE_B so every tile (including the tail) is full.
    tile_b = _round_up(min(tile_b, _round_up(batch, _LANE)), _LANE)
    padded = _round_up(batch, tile_b)
    grid = (padded // tile_b,)

    # Glue reshape/transpose/cast in plain JAX (layout plumbing, not compute).
    x2d = x.reshape(batch, INPUT_SIZE)
    xT = jnp.pad(x2d.T.astype(jnp.bfloat16), ((0, 0), (0, padded - batch)))

    w1_bf = w1.astype(jnp.bfloat16)                       # [22, 20]
    w2_bf = w2.astype(jnp.bfloat16)                       # [9, 22]
    b1_col = b1.reshape(HIDDEN_SIZE, 1).astype(jnp.float32)
    b2_col = b2.reshape(OUTPUT_SIZE, 1).astype(jnp.float32)

    outT = pl.pallas_call(
        _mlp_kernel,
        out_shape=jax.ShapeDtypeStruct((OUTPUT_SIZE, padded), jnp.float32),
        grid=grid,
        in_specs=[
            # Streamed, batch-tiled activation.
            pl.BlockSpec((INPUT_SIZE, tile_b), lambda i: (0, i)),
            # Tiny resident weights/biases (constant index maps).
            pl.BlockSpec((HIDDEN_SIZE, INPUT_SIZE), lambda i: (0, 0)),
            pl.BlockSpec((HIDDEN_SIZE, 1), lambda i: (0, 0)),
            pl.BlockSpec((OUTPUT_SIZE, HIDDEN_SIZE), lambda i: (0, 0)),
            pl.BlockSpec((OUTPUT_SIZE, 1), lambda i: (0, 0)),
        ],
        out_specs=pl.BlockSpec((OUTPUT_SIZE, tile_b), lambda i: (0, i)),
        compiler_params=pltpu.CompilerParams(
            dimension_semantics=("parallel",)),   # batch axis -> both TCs on v7x
    )(xT, w1_bf, b1_col, w2_bf, b2_col)

    return outT[:, :batch].T


def _reference(x, w1, b1, w2, b2):
    """Pure-JAX reference with the same bf16-input / f32-accumulate recipe."""
    batch = x.shape[0]
    x2d = x.reshape(batch, INPUT_SIZE).astype(jnp.bfloat16)
    h = jnp.dot(x2d, w1.astype(jnp.bfloat16).T,
                preferred_element_type=jnp.float32) + b1
    h = jax.nn.silu(h)
    out = jnp.dot(h.astype(jnp.bfloat16), w2.astype(jnp.bfloat16).T,
                  preferred_element_type=jnp.float32) + b2
    return out


def init_params(key):
    """torch.nn.Linear-style init, torch layout ([out, in] weights)."""
    k1, k2, k3, k4 = jax.random.split(key, 4)
    bound1 = 1.0 / (INPUT_SIZE ** 0.5)
    bound2 = 1.0 / (HIDDEN_SIZE ** 0.5)
    w1 = jax.random.uniform(k1, (HIDDEN_SIZE, INPUT_SIZE), jnp.float32,
                            minval=-bound1, maxval=bound1)
    b1 = jax.random.uniform(k2, (HIDDEN_SIZE,), jnp.float32,
                            minval=-bound1, maxval=bound1)
    w2 = jax.random.uniform(k3, (OUTPUT_SIZE, HIDDEN_SIZE), jnp.float32,
                            minval=-bound2, maxval=bound2)
    b2 = jax.random.uniform(k4, (OUTPUT_SIZE,), jnp.float32,
                            minval=-bound2, maxval=bound2)
    return w1, b1, w2, b2


if __name__ == "__main__":
    key = jax.random.PRNGKey(0)
    k_x, k_p, k_x2 = jax.random.split(key, 3)
    w1, b1, w2, b2 = init_params(k_p)

    # Small case: batch=2, seq_len=4, feature_dim=5 (4*5 == 20).
    x = jax.random.normal(k_x, (2, 4, 5), jnp.float32)
    out = jax.block_until_ready(simple_ann_forward(x, w1, b1, w2, b2))
    ref = _reference(x, w1, b1, w2, b2)
    assert out.shape == (2, OUTPUT_SIZE)
    assert jnp.allclose(out, ref, atol=2e-2, rtol=2e-2), float(
        jnp.max(jnp.abs(out - ref)))

    # Multi-tile case with a ragged tail: batch=300, tile_b=128 -> grid=(3,).
    x2 = jax.random.normal(k_x2, (300, 4, 5), jnp.float32)
    out2 = jax.block_until_ready(
        simple_ann_forward(x2, w1, b1, w2, b2, tile_b=128))
    ref2 = _reference(x2, w1, b1, w2, b2)
    assert out2.shape == (300, OUTPUT_SIZE)
    assert jnp.allclose(out2, ref2, atol=2e-2, rtol=2e-2), float(
        jnp.max(jnp.abs(out2 - ref2)))

    print("KERNEL_OK")
</pallas_src>

<mosaic_0001>
module attributes {stable_mosaic.version = 11 : i64} {
  func.func @_mlp_kernel(%arg0: i32, %arg1: memref<20x128xbf16, #tpu.memory_space<vmem>>, %arg2: memref<22x20xbf16, #tpu.memory_space<vmem>>, %arg3: memref<22x1xf32, #tpu.memory_space<vmem>>, %arg4: memref<9x22xbf16, #tpu.memory_space<vmem>>, %arg5: memref<9x1xf32, #tpu.memory_space<vmem>>, %arg6: memref<9x128xf32, #tpu.memory_space<vmem>>) attributes {dimension_semantics = [#tpu.dimension_semantics<parallel>], iteration_bounds = array<i64: 1>, scalar_prefetch = 0 : i64, scratch_operands = 0 : i64, tpu.core_type = #tpu.core_type<tc>, window_params = [{transform_indices = @transform_0, window_bounds = array<i64: 20, 128>}, {pipeline_mode = #tpu.pipeline_mode<synchronous>, transform_indices = @transform_1, window_bounds = array<i64: 22, 20>}, {pipeline_mode = #tpu.pipeline_mode<synchronous>, transform_indices = @transform_2, window_bounds = array<i64: 22, 1>}, {pipeline_mode = #tpu.pipeline_mode<synchronous>, transform_indices = @transform_3, window_bounds = array<i64: 9, 22>}, {pipeline_mode = #tpu.pipeline_mode<synchronous>, transform_indices = @transform_4, window_bounds = array<i64: 9, 1>}, {transform_indices = @transform_5, window_bounds = array<i64: 9, 128>}]} {
    %c0 = arith.constant 0 : index
    %c0_0 = arith.constant 0 : index
    %0 = vector.load %arg1[%c0, %c0_0] : memref<20x128xbf16, #tpu.memory_space<vmem>>, vector<20x128xbf16>
    %c0_1 = arith.constant 0 : index
    %c0_2 = arith.constant 0 : index
    %1 = vector.load %arg2[%c0_1, %c0_2] : memref<22x20xbf16, #tpu.memory_space<vmem>>, vector<22x20xbf16>
    %cst = arith.constant dense<0.000000e+00> : vector<22x128xf32>
    %2 = tpu.matmul %1, %0, %cst {dimension_numbers = #tpu.dot_dimension_numbers<[1], [0], [0], [1], [0, 0, 1, 1], [], []>} : vector<22x20xbf16>, vector<20x128xbf16>, vector<22x128xf32> -> vector<22x128xf32>
    %c0_3 = arith.constant 0 : index
    %c0_4 = arith.constant 0 : index
    %3 = vector.load %arg3[%c0_3, %c0_4] : memref<22x1xf32, #tpu.memory_space<vmem>>, vector<22x1xf32>
    %4 = vector.broadcast %3 : vector<22x1xf32> to vector<22x128xf32>
    %5 = arith.addf %2, %4 : vector<22x128xf32>
    %cst_5 = arith.constant 0.000000e+00 : f32
    %6 = vector.broadcast %cst_5 : f32 to vector<22x128xf32>
    %7 = arith.subf %6, %5 : vector<22x128xf32>
    %8 = math.exp %7 : vector<22x128xf32>
    %cst_6 = arith.constant 1.000000e+00 : f32
    %9 = vector.broadcast %cst_6 : f32 to vector<22x128xf32>
    %10 = arith.addf %9, %8 : vector<22x128xf32>
    %11 = tpu.reciprocal %10 {approx = true} : vector<22x128xf32> -> vector<22x128xf32>
    %12 = arith.mulf %5, %11 : vector<22x128xf32>
    %c0_7 = arith.constant 0 : index
    %c0_8 = arith.constant 0 : index
    %13 = vector.load %arg4[%c0_7, %c0_8] : memref<9x22xbf16, #tpu.memory_space<vmem>>, vector<9x22xbf16>
    %14 = arith.truncf %12 : vector<22x128xf32> to vector<22x128xbf16>
    %cst_9 = arith.constant dense<0.000000e+00> : vector<9x128xf32>
    %15 = tpu.matmul %13, %14, %cst_9 {dimension_numbers = #tpu.dot_dimension_numbers<[1], [0], [0], [1], [0, 0, 1, 1], [], []>} : vector<9x22xbf16>, vector<22x128xbf16>, vector<9x128xf32> -> vector<9x128xf32>
    %c0_10 = arith.constant 0 : index
    %c0_11 = arith.constant 0 : index
    %16 = vector.load %arg5[%c0_10, %c0_11] : memref<9x1xf32, #tpu.memory_space<vmem>>, vector<9x1xf32>
    %17 = vector.broadcast %16 : vector<9x1xf32> to vector<9x128xf32>
    %18 = arith.addf %15, %17 : vector<9x128xf32>
    %c0_12 = arith.constant 0 : index
    %c0_13 = arith.constant 0 : index
    %19 = vector.load %arg6[%c0_12, %c0_13] : memref<9x128xf32, #tpu.memory_space<vmem>>, vector<9x128xf32>
    tpu.vector_store %arg6[%c0_12, %c0_13], %18 {strides = array<i32>} : memref<9x128xf32, #tpu.memory_space<vmem>>, vector<9x128xf32>,
    return
  }
  func.func @transform_0(%arg0: i32) -> (i32, i32) {
    %c0_i32 = arith.constant 0 : i32
    %c0_i32_0 = arith.constant 0 : i32
    return %c0_i32, %arg0 : i32, i32
  }
  func.func @transform_1(%arg0: i32) -> (i32, i32) {
    %c0_i32 = arith.constant 0 : i32
    %c0_i32_0 = arith.constant 0 : i32
    %c0_i32_1 = arith.constant 0 : i32
    return %c0_i32, %c0_i32_0 : i32, i32
  }
  func.func @transform_2(%arg0: i32) -> (i32, i32) {
    %c0_i32 = arith.constant 0 : i32
    %c0_i32_0 = arith.constant 0 : i32
    %c0_i32_1 = arith.constant 0 : i32
    return %c0_i32, %c0_i32_0 : i32, i32
  }
  func.func @transform_3(%arg0: i32) -> (i32, i32) {
    %c0_i32 = arith.constant 0 : i32
    %c0_i32_0 = arith.constant 0 : i32
    %c0_i32_1 = arith.constant 0 : i32
    return %c0_i32, %c0_i32_0 : i32, i32
  }
  func.func @transform_4(%arg0: i32) -> (i32, i32) {
    %c0_i32 = arith.constant 0 : i32
    %c0_i32_0 = arith.constant 0 : i32
    %c0_i32_1 = arith.constant 0 : i32
    return %c0_i32, %c0_i32_0 : i32, i32
  }
  func.func @transform_5(%arg0: i32) -> (i32, i32) {
    %c0_i32 = arith.constant 0 : i32
    %c0_i32_0 = arith.constant 0 : i32
    return %c0_i32, %arg0 : i32, i32
  }
}

</mosaic_0001>

<llo_original>
// kernel: tpu_custom_call.1
$region0: #{tpu_custom_call.1}
  #allocation0 [shape = 'u32[]', space=smem, size = 0x4, offset = 0x4, fixed_abs, tag = 'smem constant byte address 0x4 - core index']
  #allocation1 [shape = 'u32[144,128]{1,0:T(1,128)}', space=vmem, size = 0x12000, scoped, tag = 'internal scratch']
  %s0 = inlined_call_operand.vmem [shape: bf16[20,128], index: 0, kind: input, shape index: {}]
  %s1 = inlined_call_operand.vmem [shape: bf16[22,20], index: 1, kind: input, shape index: {}]
  %s2 = inlined_call_operand.vmem [shape: f32[22,1], index: 2, kind: input, shape index: {}]
  %s3 = inlined_call_operand.vmem [shape: bf16[9,22], index: 3, kind: input, shape index: {}]
  %s4 = inlined_call_operand.vmem [shape: f32[9,1], index: 4, kind: input, shape index: {}]
  %s5 = inlined_call_operand.hbm [shape: f32[9,128], index: 5, kind: output, shape index: {}]
  %s6 = sld [smem:[#allocation0]]
  $region30: #{tpu_custom_call.1} parent=0
    _
  %s8 = ssub.s32 1, %s6
  %s9 = scalar_select 0, %s8, %s6
  $region1: #{tpu_custom_call.1} parent=0
    #allocation2 [shape = 'u8[8192]{0}', space=vmem, size = 0x2000, scoped, tag = 'output window, operand 0, single buffered']
    #allocation3 [shape = 's32[1]{0}', space=sflag, size = 0x4, scoped, tag = 'scoped memory for tpu_custom_call.1']
    %10 = vsyncpa [#allocation3], 0
    // Predicated region
    $region2: #{tpu_custom_call.1} parent=1 // pred_check
      _
    $region3: #{tpu_custom_call.1} parent=1 // pred_check_branch
      %12 = sbr.rel (0) target = $region5
    $region4: #{tpu_custom_call.1} parent=1 // pred_region
      _
    $region5: #{tpu_custom_call.1} parent=1 // pred_fallthru
      _
    // Predicated region
    $region6: #{tpu_custom_call.1} parent=1 // pred_check
      _
    $region7: #{tpu_custom_call.1} parent=1 // pred_check_branch
      %14 = sbr.rel (0) target = $region9
    $region8: #{tpu_custom_call.1} parent=1 // pred_region
      _
    $region9: #{tpu_custom_call.1} parent=1 // pred_fallthru
      _
    // Predicated region
    $region10: #{tpu_custom_call.1} parent=1 // pred_check
      _
    $region11: #{tpu_custom_call.1} parent=1 // pred_check_branch
      %16 = sbr.rel (0) target = $region13
    $region12: #{tpu_custom_call.1} parent=1 // pred_region
      _
    $region13: #{tpu_custom_call.1} parent=1 // pred_fallthru
      _
    // Predicated region
    $region14: #{tpu_custom_call.1} parent=1 // pred_check
      _
    $region15: #{tpu_custom_call.1} parent=1 // pred_check_branch
      %18 = sbr.rel (0) target = $region17
    $region16: #{tpu_custom_call.1} parent=1 // pred_region
      _
    $region17: #{tpu_custom_call.1} parent=1 // pred_fallthru
      _
    // Predicated region
    $region18: #{tpu_custom_call.1} parent=1 // pred_check
      _
    $region19: #{tpu_custom_call.1} parent=1 // pred_check_branch
      %20 = sbr.rel (0) target = $region21
    $region20: #{tpu_custom_call.1} parent=1 // pred_region
      _
    $region21: #{tpu_custom_call.1} parent=1 // pred_fallthru
      _
    %v22 = vld [vmem:[%s0] sm:$0xf]
    %v23 = vld [vmem:[%s0 + $0x4] sm:$0xf]
    %v24 = vld [vmem:[%s0 + $0x8] sm:$0x3]
    %v25 = vld [vmem:[%s1] sm:$0xf]
    %v26 = vld [vmem:[%s1 + $0x4] sm:$0xf]
    %v27 = vld [vmem:[%s1 + $0x8] sm:$0x7]
    %v28 = vld [vmem:[%s2] sm:$0xff]
    %v29 = vld [vmem:[%s2 + $0x8] sm:$0xff]
    %v30 = vld [vmem:[%s2 + $0x10] sm:$0x3f]
    %32 = vset.pattern.permute.xlu0 0
    %33 = vperm.xlu0 %32, %v28
    %v34 = vpop.permute.xlu0 %33
    %37 = vset.pattern.permute.xlu0 0
    %38 = vperm.xlu0 %37, %v29
    %v39 = vpop.permute.xlu0 %38
    %42 = vset.pattern.permute.xlu0 0
    %43 = vperm.xlu0 %42, %v30
    %v44 = vpop.permute.xlu0 %43
    %v49 = vunpack.c.l.b16 %v25
    %v50 = vunpack.c.l.b16 %v26
    %v51 = vunpack.c.l.b16 %v27
    %v52 = vpack.c.b16 %v50, %v49
    %v53 = vpack.c.b16 %v51, %v51
    %v57 = vunpack.c.l.b16 %v22
    %v58 = vunpack.c.l.b16 %v23
    %v59 = vunpack.c.l.b16 %v24
    %v60 = vpack.c.b16 %v58, %v57
    %v61 = vpack.c.b16 %v59, %v59
    %vm63 = vcmask 162816
    %v65 = vsel %vm63, %v52, 0
    %v68 = vsel %vm63, %v53, 0
    %vm70 = vcmask 1041408
    %v72 = vsel %vm70, %v61, 0
    %74 = vmatprep.subr.bf16.mxu0 0
    %75 = vmatpush1.bf16.msra.mxu0 0
    %76 = vmatprep.subr.bf16.mxu0 0
    %77 = vmatpush1.bf16.msra.mxu0 0
    %78 = vmatprep.subr.bf16.mxu0 0
    %79 = vmatpush1.bf16.msra.mxu0 0
    %80 = vmatprep.subr.bf16.mxu0 0
    %81 = vmatpush1.bf16.msra.mxu0 0
    %82 = vmatprep.subr.bf16.mxu0 0
    %83 = vmatpush1.bf16.msra.mxu0 0
    %84 = vmatprep.subr.bf16.mxu0 0
    %85 = vmatpush1.bf16.msra.mxu0 0
    %86 = vmatprep.subr.bf16.mxu0 0
    %87 = vmatpush1.bf16.msra.mxu0 %v72
    %88 = vmatprep.subr.bf16.mxu0 0
    %89 = vmatpush1.bf16.msra.mxu0 %v60
    %90 = vmatprep.subr.bf16.mxu0 0
    %91 = vmatpush2.bf16.msra.mxu0 0
    %92 = vmatprep.subr.bf16.mxu0 0
    %93 = vmatpush2.bf16.msra.mxu0 0
    %94 = vmatprep.subr.bf16.mxu0 0
    %95 = vmatpush2.bf16.msra.mxu0 0
    %96 = vmatprep.subr.bf16.mxu0 0
    %97 = vmatpush2.bf16.msra.mxu0 0
    %98 = vmatprep.subr.bf16.mxu0 0
    %99 = vmatpush2.bf16.msra.mxu0 0
    %100 = vmatprep.subr.bf16.mxu0 0
    %101 = vmatpush2.bf16.msra.mxu0 0
    %102 = vmatprep.subr.bf16.mxu0 0
    %103 = vmatpush2.bf16.msra.mxu0 0
    %104 = vmatprep.subr.bf16.mxu0 0
    %105 = vmatpush2.bf16.msra.mxu0 0
    %106 = vmatprep.mubr.bf16.mxu0 0
    %107 = vmatmul.mubr.bf16.gmra.mxu0 %v65
    %v108 = vpop.f32.mrf.mxu0
    %v109 = vadd.f32 %v34, %v108
    %v110 = vpop.f32.mrf.mxu0
    %v111 = vpop.f32.mrf.mxu0
    %v112 = vadd.f32 %v39, %v111
    %v113 = vpop.f32.mrf.mxu0
    %114 = vmatprep.mubr.bf16.mxu0 0
    %115 = vmatmul.mubr.bf16.gmra.mxu0 %v68
    %v116 = vpop.f32.mrf.mxu0
    %v117 = vadd.f32 %v44, %v116
    %v118 = vpop.f32.mrf.mxu0
    %v119 = vpop.f32.mrf.mxu0
    %v120 = vpop.f32.mrf.mxu0
    %121 = vdwg.mxu0
    %v122 = vsub.f32 0.0, %v109
    %v123 = vsub.f32 0.0, %v112
    %v124 = vsub.f32 0.0, %v117
    %v125 = vmul.f32 %v122, 1.442695
    %v126 = vpow.pop %v125
    %v127 = vmul.f32 %v123, 1.442695
    %v128 = vpow.pop %v127
    %v129 = vmul.f32 %v124, 1.442695
    %v130 = vpow.pop %v129
    %v131 = vadd.f32 %v126, 1.0
    %v132 = vadd.f32 %v128, 1.0
    %v133 = vadd.f32 %v130, 1.0
    %v134 = vrcp.pop %v131
    %v135 = vrcp.pop %v132
    %v136 = vrcp.pop %v133
    %v137 = vmul.f32 %v109, %v134
    %v138 = vmul.f32 %v112, %v135
    %v139 = vmul.f32 %v117, %v136
    %v140 = vld [vmem:[%s3] sm:$0xf]
    %v141 = vld [vmem:[%s3 + $0x4] sm:$0x1]
    %v142 = vpack.c.bf16 %v138, %v137
    %v143 = vpack.c.bf16 %v139, %v139
    %v144 = vld [vmem:[%s4] sm:$0xff]
    %v145 = vld [vmem:[%s4 + $0x8] sm:$0x1]
    %147 = vset.pattern.permute.xlu0 0
    %148 = vperm.xlu0 %147, %v144
    %v149 = vpop.permute.xlu0 %148
    %152 = vset.pattern.permute.xlu0 0
    %153 = vperm.xlu0 %152, %v145
    %v154 = vpop.permute.xlu0 %153
    %v158 = vunpack.c.l.b16 %v140
    %v159 = vunpack.c.l.b16 %v141
    %v160 = vpack.c.b16 %v159, %v158
    %vm161 = vcmask 179200
    %v163 = vsel %vm161, %v160, 0
    %vm165 = vcmask 1042432
    %v167 = vsel %vm165, %v143, 0
    %169 = vmatprep.subr.bf16.mxu0 0
    %170 = vmatpush1.bf16.msra.mxu0 0
    %171 = vmatprep.subr.bf16.mxu0 0
    %172 = vmatpush1.bf16.msra.mxu0 0
    %173 = vmatprep.subr.bf16.mxu0 0
    %174 = vmatpush1.bf16.msra.mxu0 0
    %175 = vmatprep.subr.bf16.mxu0 0
    %176 = vmatpush1.bf16.msra.mxu0 0
    %177 = vmatprep.subr.bf16.mxu0 0
    %178 = vmatpush1.bf16.msra.mxu0 0
    %179 = vmatprep.subr.bf16.mxu0 0
    %180 = vmatpush1.bf16.msra.mxu0 0
    %181 = vmatprep.subr.bf16.mxu0 0
    %182 = vmatpush1.bf16.msra.mxu0 %v167
    %183 = vmatprep.subr.bf16.mxu0 0
    %184 = vmatpush1.bf16.msra.mxu0 %v142
    %185 = vmatprep.subr.bf16.mxu0 0
    %186 = vmatpush2.bf16.msra.mxu0 0
    %187 = vmatprep.subr.bf16.mxu0 0
    %188 = vmatpush2.bf16.msra.mxu0 0
    %189 = vmatprep.subr.bf16.mxu0 0
    %190 = vmatpush2.bf16.msra.mxu0 0
    %191 = vmatprep.subr.bf16.mxu0 0
    %192 = vmatpush2.bf16.msra.mxu0 0
    %193 = vmatprep.subr.bf16.mxu0 0
    %194 = vmatpush2.bf16.msra.mxu0 0
    %195 = vmatprep.subr.bf16.mxu0 0
    %196 = vmatpush2.bf16.msra.mxu0 0
    %197 = vmatprep.subr.bf16.mxu0 0
    %198 = vmatpush2.bf16.msra.mxu0 0
    %199 = vmatprep.subr.bf16.mxu0 0
    %200 = vmatpush2.bf16.msra.mxu0 0
    %201 = vmatprep.mubr.bf16.mxu0 0
    %202 = vmatmul.mubr.bf16.gmra.mxu0 %v163
    %v203 = vpop.f32.mrf.mxu0
    %v204 = vadd.f32 %v149, %v203
    %v205 = vpop.f32.mrf.mxu0
    %v206 = vpop.f32.mrf.mxu0
    %v207 = vadd.f32 %v154, %v206
    %v208 = vpop.f32.mrf.mxu0
    %209 = vdwg.mxu0
    %210 = vst [vmem:[#allocation2] sm:$0xff] %v204
    %211 = vst [vmem:[#allocation2 + $0x8] sm:$0x1] %v207
    // Predicated region
    $region22: #{tpu_custom_call.1} parent=1 // pred_check
      _
    $region23: #{tpu_custom_call.1} parent=1 // pred_check_branch
      %213 = sbr.rel (0) target = $region25
    $region24: #{tpu_custom_call.1} parent=1 // pred_region
      %s215 = ssub.s32 256, 256
      %216 = vsyncadd [#allocation3], %s215
      %s217 = sshll.u32 [#allocation2], 4
      %s218 = int_to_ptr.vmem [resolvable:$true] %s217
      %223 = dma.vmem_to_hbm [thread:$0]  %s218, 256, %s5, [#allocation3], 128, 128, 8
    $region25: #{tpu_custom_call.1} parent=1 // pred_fallthru
      _
    // Predicated region
    $region26: #{tpu_custom_call.1} parent=1 // pred_check
      _
    $region27: #{tpu_custom_call.1} parent=1 // pred_check_branch
      %225 = sbr.rel (0) target = $region29
    $region28: #{tpu_custom_call.1} parent=1 // pred_region
      %226 = dma.done [#allocation3], 256
    $region29: #{tpu_custom_call.1} parent=1 // pred_fallthru
      _
    %227 = vsyncpa [#allocation3], 1

</llo_original>
